<compile_context>
chip_gen: v7x
topology: tpu7x:2x2x1
jax: 0.10.0
libtpu: 0.0.40
codegen_flags: <defaults>
</compile_context>

<pallas_src>
import math

import jax
import jax.numpy as jnp
from jax.experimental import pallas as pl
from jax.experimental.pallas import tpu as pltpu

HIDDEN = 256          # hidden width; also padded input width (>= state_dim+action_dim)
PAD_OUT = 128         # lane-dense padded width of the scalar value head
N_LAYERS = 6
MAX_TILE_M = 256      # batch rows per grid step


def _critic_kernel(x_ref, w_ref, b_ref, out_ref):
    """x: (TM, HIDDEN) f32, w: (6, HIDDEN, HIDDEN) bf16, b: (6, 1, HIDDEN) f32,
    out: (TM, PAD_OUT) f32."""
    h = x_ref[...]
    for i in range(N_LAYERS - 1):
        h = jnp.dot(h.astype(jnp.bfloat16), w_ref[i],
                    preferred_element_type=jnp.float32) + b_ref[i]
        h = jnp.maximum(h, 0.0)
    w_last = w_ref[N_LAYERS - 1][:, :PAD_OUT]          # (HIDDEN, PAD_OUT) bf16
    b_last = b_ref[N_LAYERS - 1][:, :PAD_OUT]          # (1, PAD_OUT) f32
    out_ref[...] = jnp.dot(h.astype(jnp.bfloat16), w_last,
                           preferred_element_type=jnp.float32) + b_last


def init_critic_params(key, state_dim, action_dim):
    """PyTorch nn.Linear default init: U[-1/sqrt(fan_in), 1/sqrt(fan_in)]."""
    dims = [state_dim + action_dim] + [HIDDEN] * 5 + [1]
    params = []
    for i in range(N_LAYERS):
        fan_in, fan_out = dims[i], dims[i + 1]
        key, kw, kb = jax.random.split(key, 3)
        bound = 1.0 / math.sqrt(fan_in)
        w = jax.random.uniform(kw, (fan_in, fan_out), jnp.float32, -bound, bound)
        b = jax.random.uniform(kb, (fan_out,), jnp.float32, -bound, bound)
        params.append((w, b))
    return params


def pack_critic_params(params):
    """Zero-pad every layer to (HIDDEN, HIDDEN)/(HIDDEN,) and stack into slabs.
    Call ONCE; the slabs are what the per-step forward consumes (no per-call
    padding / extra HBM traffic)."""
    ws, bs = [], []
    for w, b in params:
        fan_in, fan_out = w.shape
        ws.append(jnp.pad(w, ((0, HIDDEN - fan_in), (0, HIDDEN - fan_out))))
        bs.append(jnp.pad(b, ((0, HIDDEN - fan_out),)))
    w_slab = jnp.stack(ws).astype(jnp.bfloat16)                # (6, 256, 256) bf16
    b_slab = jnp.stack(bs).astype(jnp.float32)[:, None, :]     # (6, 1, 256) f32
    return w_slab, b_slab


@jax.jit
def critic_forward(state, action, w_slab, b_slab):
    """state: (B, state_dim), action: (B, action_dim) -> (B, 1) f32."""
    batch = state.shape[0]
    x = jnp.concatenate(
        [state.astype(jnp.float32), action.astype(jnp.float32)], axis=1)
    in_dim = x.shape[1]

    # Batch tiling: round up to a sublane multiple, cap the tile at MAX_TILE_M.
    bp8 = batch + ((-batch) % 8)
    tm = min(MAX_TILE_M, bp8)
    bp = batch + ((-batch) % tm)
    x = jnp.pad(x, ((0, bp - batch), (0, HIDDEN - in_dim)))

    out = pl.pallas_call(
        _critic_kernel,
        out_shape=jax.ShapeDtypeStruct((bp, PAD_OUT), jnp.float32),
        grid_spec=pltpu.PrefetchScalarGridSpec(
            num_scalar_prefetch=0,
            grid=(bp // tm,),
            in_specs=[
                pl.BlockSpec((tm, HIDDEN), lambda i: (i, 0)),
                # Constant block index -> weights/biases stay VMEM-resident.
                pl.BlockSpec((N_LAYERS, HIDDEN, HIDDEN), lambda i: (0, 0, 0)),
                pl.BlockSpec((N_LAYERS, 1, HIDDEN), lambda i: (0, 0, 0)),
            ],
            out_specs=pl.BlockSpec((tm, PAD_OUT), lambda i: (i, 0)),
        ),
        compiler_params=pltpu.CompilerParams(
            dimension_semantics=("parallel",)),
    )(x, w_slab, b_slab)

    return out[:batch, :1]


def critic_forward_ref_f32(state, action, params):
    """Pure-JAX f32 reference."""
    h = jnp.concatenate([state, action], axis=1).astype(jnp.float32)
    for i, (w, b) in enumerate(params):
        h = h @ w + b
        if i < N_LAYERS - 1:
            h = jnp.maximum(h, 0.0)
    return h


def critic_forward_ref_bf16(state, action, params):
    """Reference using the same bf16-matmul / f32-accumulate recipe as the kernel."""
    h = jnp.concatenate([state, action], axis=1).astype(jnp.float32)
    for i, (w, b) in enumerate(params):
        h = jnp.dot(h.astype(jnp.bfloat16), w.astype(jnp.bfloat16),
                    preferred_element_type=jnp.float32) + b
        if i < N_LAYERS - 1:
            h = jnp.maximum(h, 0.0)
    return h


if __name__ == "__main__":
    # Pendulum-v1 critic: state_dim=3, action_dim=1.
    state_dim, action_dim = 3, 1
    batch = 2

    key = jax.random.PRNGKey(0)
    key, pkey, skey, akey = jax.random.split(key, 4)
    params = init_critic_params(pkey, state_dim, action_dim)
    state = jax.random.normal(skey, (batch, state_dim), dtype=jnp.float32)
    action = jax.random.normal(akey, (batch, action_dim), dtype=jnp.float32)

    # Pack / pad the weights once, outside the per-call path.
    w_slab, b_slab = pack_critic_params(params)

    out = critic_forward(state, action, w_slab, b_slab)
    out = jax.block_until_ready(out)
    assert out.shape == (batch, 1), out.shape

    ref_bf16 = critic_forward_ref_bf16(state, action, params)
    ref_f32 = critic_forward_ref_f32(state, action, params)
    # Kernel should match its own bf16/f32-accum recipe tightly, and the pure
    # f32 reference within bf16-induced error.
    assert jnp.allclose(out, ref_bf16, atol=2e-3, rtol=2e-3), (out, ref_bf16)
    assert jnp.allclose(out, ref_f32, atol=5e-2, rtol=5e-2), (out, ref_f32)

    print("KERNEL_OK")
</pallas_src>

<mosaic_0001>
module attributes {stable_mosaic.version = 11 : i64} {
  func.func @_critic_kernel(%arg0: i32, %arg1: memref<8x256xf32, #tpu.memory_space<vmem>>, %arg2: memref<6x256x256xbf16, #tpu.memory_space<vmem>>, %arg3: memref<6x1x256xf32, #tpu.memory_space<vmem>>, %arg4: memref<8x128xf32, #tpu.memory_space<vmem>>) attributes {dimension_semantics = [#tpu.dimension_semantics<parallel>], iteration_bounds = array<i64: 1>, scalar_prefetch = 0 : i64, scratch_operands = 0 : i64, tpu.core_type = #tpu.core_type<tc>, window_params = [{transform_indices = @transform_0, window_bounds = array<i64: 8, 256>}, {pipeline_mode = #tpu.pipeline_mode<synchronous>, transform_indices = @transform_1, window_bounds = array<i64: 6, 256, 256>}, {pipeline_mode = #tpu.pipeline_mode<synchronous>, transform_indices = @transform_2, window_bounds = array<i64: 6, 1, 256>}, {transform_indices = @transform_3, window_bounds = array<i64: 8, 128>}]} {
    %c0 = arith.constant 0 : index
    %c0_0 = arith.constant 0 : index
    %0 = vector.load %arg1[%c0, %c0_0] : memref<8x256xf32, #tpu.memory_space<vmem>>, vector<8x256xf32>
    %1 = arith.truncf %0 : vector<8x256xf32> to vector<8x256xbf16>
    %c0_1 = arith.constant 0 : index
    %c0_2 = arith.constant 0 : index
    %c0_3 = arith.constant 0 : index
    %2 = vector.load %arg2[%c0_1, %c0_2, %c0_3] : memref<6x256x256xbf16, #tpu.memory_space<vmem>>, vector<1x256x256xbf16>
    %3 = vector.shape_cast %2 : vector<1x256x256xbf16> to vector<256x256xbf16>
    %cst = arith.constant dense<0.000000e+00> : vector<8x256xf32>
    %4 = tpu.matmul %1, %3, %cst {dimension_numbers = #tpu.dot_dimension_numbers<[1], [0], [0], [1], [0, 0, 1, 1], [], []>} : vector<8x256xbf16>, vector<256x256xbf16>, vector<8x256xf32> -> vector<8x256xf32>
    %c0_4 = arith.constant 0 : index
    %c0_5 = arith.constant 0 : index
    %c0_6 = arith.constant 0 : index
    %5 = vector.load %arg3[%c0_4, %c0_5, %c0_6] : memref<6x1x256xf32, #tpu.memory_space<vmem>>, vector<1x1x256xf32>
    %6 = vector.shape_cast %5 : vector<1x1x256xf32> to vector<1x256xf32>
    %7 = vector.broadcast %6 : vector<1x256xf32> to vector<8x256xf32>
    %8 = arith.addf %4, %7 : vector<8x256xf32>
    %cst_7 = arith.constant 0.000000e+00 : f32
    %9 = vector.broadcast %cst_7 : f32 to vector<8x256xf32>
    %10 = arith.maximumf %8, %9 : vector<8x256xf32>
    %11 = arith.truncf %10 : vector<8x256xf32> to vector<8x256xbf16>
    %c1 = arith.constant 1 : index
    %c0_8 = arith.constant 0 : index
    %c0_9 = arith.constant 0 : index
    %12 = vector.load %arg2[%c1, %c0_8, %c0_9] : memref<6x256x256xbf16, #tpu.memory_space<vmem>>, vector<1x256x256xbf16>
    %13 = vector.shape_cast %12 : vector<1x256x256xbf16> to vector<256x256xbf16>
    %cst_10 = arith.constant dense<0.000000e+00> : vector<8x256xf32>
    %14 = tpu.matmul %11, %13, %cst_10 {dimension_numbers = #tpu.dot_dimension_numbers<[1], [0], [0], [1], [0, 0, 1, 1], [], []>} : vector<8x256xbf16>, vector<256x256xbf16>, vector<8x256xf32> -> vector<8x256xf32>
    %c1_11 = arith.constant 1 : index
    %c0_12 = arith.constant 0 : index
    %c0_13 = arith.constant 0 : index
    %15 = vector.load %arg3[%c1_11, %c0_12, %c0_13] : memref<6x1x256xf32, #tpu.memory_space<vmem>>, vector<1x1x256xf32>
    %16 = vector.shape_cast %15 : vector<1x1x256xf32> to vector<1x256xf32>
    %17 = vector.broadcast %16 : vector<1x256xf32> to vector<8x256xf32>
    %18 = arith.addf %14, %17 : vector<8x256xf32>
    %cst_14 = arith.constant 0.000000e+00 : f32
    %19 = vector.broadcast %cst_14 : f32 to vector<8x256xf32>
    %20 = arith.maximumf %18, %19 : vector<8x256xf32>
    %21 = arith.truncf %20 : vector<8x256xf32> to vector<8x256xbf16>
    %c2 = arith.constant 2 : index
    %c0_15 = arith.constant 0 : index
    %c0_16 = arith.constant 0 : index
    %22 = vector.load %arg2[%c2, %c0_15, %c0_16] : memref<6x256x256xbf16, #tpu.memory_space<vmem>>, vector<1x256x256xbf16>
    %23 = vector.shape_cast %22 : vector<1x256x256xbf16> to vector<256x256xbf16>
    %cst_17 = arith.constant dense<0.000000e+00> : vector<8x256xf32>
    %24 = tpu.matmul %21, %23, %cst_17 {dimension_numbers = #tpu.dot_dimension_numbers<[1], [0], [0], [1], [0, 0, 1, 1], [], []>} : vector<8x256xbf16>, vector<256x256xbf16>, vector<8x256xf32> -> vector<8x256xf32>
    %c2_18 = arith.constant 2 : index
    %c0_19 = arith.constant 0 : index
    %c0_20 = arith.constant 0 : index
    %25 = vector.load %arg3[%c2_18, %c0_19, %c0_20] : memref<6x1x256xf32, #tpu.memory_space<vmem>>, vector<1x1x256xf32>
    %26 = vector.shape_cast %25 : vector<1x1x256xf32> to vector<1x256xf32>
    %27 = vector.broadcast %26 : vector<1x256xf32> to vector<8x256xf32>
    %28 = arith.addf %24, %27 : vector<8x256xf32>
    %cst_21 = arith.constant 0.000000e+00 : f32
    %29 = vector.broadcast %cst_21 : f32 to vector<8x256xf32>
    %30 = arith.maximumf %28, %29 : vector<8x256xf32>
    %31 = arith.truncf %30 : vector<8x256xf32> to vector<8x256xbf16>
    %c3 = arith.constant 3 : index
    %c0_22 = arith.constant 0 : index
    %c0_23 = arith.constant 0 : index
    %32 = vector.load %arg2[%c3, %c0_22, %c0_23] : memref<6x256x256xbf16, #tpu.memory_space<vmem>>, vector<1x256x256xbf16>
    %33 = vector.shape_cast %32 : vector<1x256x256xbf16> to vector<256x256xbf16>
    %cst_24 = arith.constant dense<0.000000e+00> : vector<8x256xf32>
    %34 = tpu.matmul %31, %33, %cst_24 {dimension_numbers = #tpu.dot_dimension_numbers<[1], [0], [0], [1], [0, 0, 1, 1], [], []>} : vector<8x256xbf16>, vector<256x256xbf16>, vector<8x256xf32> -> vector<8x256xf32>
    %c3_25 = arith.constant 3 : index
    %c0_26 = arith.constant 0 : index
    %c0_27 = arith.constant 0 : index
    %35 = vector.load %arg3[%c3_25, %c0_26, %c0_27] : memref<6x1x256xf32, #tpu.memory_space<vmem>>, vector<1x1x256xf32>
    %36 = vector.shape_cast %35 : vector<1x1x256xf32> to vector<1x256xf32>
    %37 = vector.broadcast %36 : vector<1x256xf32> to vector<8x256xf32>
    %38 = arith.addf %34, %37 : vector<8x256xf32>
    %cst_28 = arith.constant 0.000000e+00 : f32
    %39 = vector.broadcast %cst_28 : f32 to vector<8x256xf32>
    %40 = arith.maximumf %38, %39 : vector<8x256xf32>
    %41 = arith.truncf %40 : vector<8x256xf32> to vector<8x256xbf16>
    %c4 = arith.constant 4 : index
    %c0_29 = arith.constant 0 : index
    %c0_30 = arith.constant 0 : index
    %42 = vector.load %arg2[%c4, %c0_29, %c0_30] : memref<6x256x256xbf16, #tpu.memory_space<vmem>>, vector<1x256x256xbf16>
    %43 = vector.shape_cast %42 : vector<1x256x256xbf16> to vector<256x256xbf16>
    %cst_31 = arith.constant dense<0.000000e+00> : vector<8x256xf32>
    %44 = tpu.matmul %41, %43, %cst_31 {dimension_numbers = #tpu.dot_dimension_numbers<[1], [0], [0], [1], [0, 0, 1, 1], [], []>} : vector<8x256xbf16>, vector<256x256xbf16>, vector<8x256xf32> -> vector<8x256xf32>
    %c4_32 = arith.constant 4 : index
    %c0_33 = arith.constant 0 : index
    %c0_34 = arith.constant 0 : index
    %45 = vector.load %arg3[%c4_32, %c0_33, %c0_34] : memref<6x1x256xf32, #tpu.memory_space<vmem>>, vector<1x1x256xf32>
    %46 = vector.shape_cast %45 : vector<1x1x256xf32> to vector<1x256xf32>
    %47 = vector.broadcast %46 : vector<1x256xf32> to vector<8x256xf32>
    %48 = arith.addf %44, %47 : vector<8x256xf32>
    %cst_35 = arith.constant 0.000000e+00 : f32
    %49 = vector.broadcast %cst_35 : f32 to vector<8x256xf32>
    %50 = arith.maximumf %48, %49 : vector<8x256xf32>
    %c5 = arith.constant 5 : index
    %c0_36 = arith.constant 0 : index
    %c0_37 = arith.constant 0 : index
    %51 = vector.load %arg2[%c5, %c0_36, %c0_37] : memref<6x256x256xbf16, #tpu.memory_space<vmem>>, vector<1x256x256xbf16>
    %52 = vector.shape_cast %51 : vector<1x256x256xbf16> to vector<256x256xbf16>
    %53 = vector.extract_strided_slice %52 {offsets = [0, 0], sizes = [256, 128], strides = [1, 1]} : vector<256x256xbf16> to vector<256x128xbf16>
    %c5_38 = arith.constant 5 : index
    %c0_39 = arith.constant 0 : index
    %c0_40 = arith.constant 0 : index
    %54 = vector.load %arg3[%c5_38, %c0_39, %c0_40] : memref<6x1x256xf32, #tpu.memory_space<vmem>>, vector<1x1x256xf32>
    %55 = vector.shape_cast %54 : vector<1x1x256xf32> to vector<1x256xf32>
    %56 = vector.extract_strided_slice %55 {offsets = [0, 0], sizes = [1, 128], strides = [1, 1]} : vector<1x256xf32> to vector<1x128xf32>
    %57 = arith.truncf %50 : vector<8x256xf32> to vector<8x256xbf16>
    %cst_41 = arith.constant dense<0.000000e+00> : vector<8x128xf32>
    %58 = tpu.matmul %57, %53, %cst_41 {dimension_numbers = #tpu.dot_dimension_numbers<[1], [0], [0], [1], [0, 0, 1, 1], [], []>} : vector<8x256xbf16>, vector<256x128xbf16>, vector<8x128xf32> -> vector<8x128xf32>
    %59 = vector.broadcast %56 : vector<1x128xf32> to vector<8x128xf32>
    %60 = arith.addf %58, %59 : vector<8x128xf32>
    %c0_42 = arith.constant 0 : index
    %c0_43 = arith.constant 0 : index
    %61 = vector.load %arg4[%c0_42, %c0_43] : memref<8x128xf32, #tpu.memory_space<vmem>>, vector<8x128xf32>
    tpu.vector_store %arg4[%c0_42, %c0_43], %60 {strides = array<i32>} : memref<8x128xf32, #tpu.memory_space<vmem>>, vector<8x128xf32>,
    return
  }
  func.func @transform_0(%arg0: i32) -> (i32, i32) {
    %c0_i32 = arith.constant 0 : i32
    %c0_i32_0 = arith.constant 0 : i32
    return %arg0, %c0_i32 : i32, i32
  }
  func.func @transform_1(%arg0: i32) -> (i32, i32, i32) {
    %c0_i32 = arith.constant 0 : i32
    %c0_i32_0 = arith.constant 0 : i32
    %c0_i32_1 = arith.constant 0 : i32
    %c0_i32_2 = arith.constant 0 : i32
    return %c0_i32, %c0_i32_0, %c0_i32_1 : i32, i32, i32
  }
  func.func @transform_2(%arg0: i32) -> (i32, i32, i32) {
    %c0_i32 = arith.constant 0 : i32
    %c0_i32_0 = arith.constant 0 : i32
    %c0_i32_1 = arith.constant 0 : i32
    %c0_i32_2 = arith.constant 0 : i32
    return %c0_i32, %c0_i32_0, %c0_i32_1 : i32, i32, i32
  }
  func.func @transform_3(%arg0: i32) -> (i32, i32) {
    %c0_i32 = arith.constant 0 : i32
    %c0_i32_0 = arith.constant 0 : i32
    return %arg0, %c0_i32 : i32, i32
  }
}

</mosaic_0001>

<llo_original>
// kernel: critic_forward.1
$region0: #{critic_forward.1}
  #allocation0 [shape = 'u32[]', space=smem, size = 0x4, offset = 0x4, fixed_abs, tag = 'smem constant byte address 0x4 - core index']
  #allocation1 [shape = 'u32[144,128]{1,0:T(1,128)}', space=vmem, size = 0x12000, scoped, tag = 'internal scratch']
  %s0 = inlined_call_operand.vmem [shape: f32[8,256], index: 0, kind: input, shape index: {}]
  %s1 = inlined_call_operand.hbm [shape: bf16[6,256,256], index: 1, kind: input, shape index: {}]
  %s2 = inlined_call_operand.vmem [shape: f32[6,1,256], index: 2, kind: input, shape index: {}]
  %s3 = inlined_call_operand.vmem [shape: f32[8,128], index: 3, kind: output, shape index: {}]
  %s4 = sld [smem:[#allocation0]]
  $region26: #{critic_forward.1} parent=0
    _
  %s6 = ssub.s32 1, %s4
  %s7 = scalar_select 0, %s6, %s4
  $region1: #{critic_forward.1} parent=0
    #allocation2 [shape = 'u8[786432]{0}', space=vmem, size = 0xc0000, scoped, tag = 'input window, operand 1, single buffered']
    #allocation3 [shape = 's32[1]{0}', space=sflag, size = 0x4, scoped, tag = 'scoped memory for critic_forward.1']
    %8 = vsyncpa [#allocation3], 0
    // Predicated region
    $region2: #{critic_forward.1} parent=1 // pred_check
      _
    $region3: #{critic_forward.1} parent=1 // pred_check_branch
      %10 = sbr.rel (0) target = $region5
    $region4: #{critic_forward.1} parent=1 // pred_region
      _
    $region5: #{critic_forward.1} parent=1 // pred_fallthru
      _
    // Predicated region
    $region6: #{critic_forward.1} parent=1 // pred_check
      _
    $region7: #{critic_forward.1} parent=1 // pred_check_branch
      %12 = sbr.rel (0) target = $region9
    $region8: #{critic_forward.1} parent=1 // pred_region
      %s14 = ssub.s32 24576, 24576
      %15 = vsyncadd [#allocation3], %s14
      %s16 = sshll.u32 [#allocation2], 4
      %s17 = int_to_ptr.vmem [resolvable:$true] %s16
      %22 = dma.hbm_to_vmem [thread:$0]  %s1, 24576, %s17, [#allocation3], 128, 128, 8
    $region9: #{critic_forward.1} parent=1 // pred_fallthru
      _
    // Predicated region
    $region10: #{critic_forward.1} parent=1 // pred_check
      _
    $region11: #{critic_forward.1} parent=1 // pred_check_branch
      %24 = sbr.rel (0) target = $region13
    $region12: #{critic_forward.1} parent=1 // pred_region
      _
    $region13: #{critic_forward.1} parent=1 // pred_fallthru
      _
    // Predicated region
    $region14: #{critic_forward.1} parent=1 // pred_check
      _
    $region15: #{critic_forward.1} parent=1 // pred_check_branch
      %26 = sbr.rel (0) target = $region17
    $region16: #{critic_forward.1} parent=1 // pred_region
      %27 = dma.done [#allocation3], 24576
    $region17: #{critic_forward.1} parent=1 // pred_fallthru
      _
    %v29 = vld [vmem:[%s0] sm:$0xff]
    %v30 = vld [vmem:[%s0 + $0x8] sm:$0xff]
    %v31 = vpack.c.bf16 %v29, %v29
    %v32 = vpack.c.bf16 %v30, %v30
    %v33 = vld [vmem:[#allocation2] sm:$0xff]
    %v34 = vld [vmem:[#allocation2 + $0x8] sm:$0xff]
    %v35 = vld [vmem:[#allocation2 + $0x10] sm:$0xff]
    %v36 = vld [vmem:[#allocation2 + $0x18] sm:$0xff]
    %v37 = vld [vmem:[#allocation2 + $0x20] sm:$0xff]
    %v38 = vld [vmem:[#allocation2 + $0x28] sm:$0xff]
    %v39 = vld [vmem:[#allocation2 + $0x30] sm:$0xff]
    %v40 = vld [vmem:[#allocation2 + $0x38] sm:$0xff]
    %v41 = vld [vmem:[#allocation2 + $0x40] sm:$0xff]
    %v42 = vld [vmem:[#allocation2 + $0x48] sm:$0xff]
    %v43 = vld [vmem:[#allocation2 + $0x50] sm:$0xff]
    %v44 = vld [vmem:[#allocation2 + $0x58] sm:$0xff]
    %v45 = vld [vmem:[#allocation2 + $0x60] sm:$0xff]
    %v46 = vld [vmem:[#allocation2 + $0x68] sm:$0xff]
    %v47 = vld [vmem:[#allocation2 + $0x70] sm:$0xff]
    %v48 = vld [vmem:[#allocation2 + $0x78] sm:$0xff]
    %v49 = vld [vmem:[#allocation2 + $0x80] sm:$0xff]
    %v50 = vld [vmem:[#allocation2 + $0x88] sm:$0xff]
    %v51 = vld [vmem:[#allocation2 + $0x90] sm:$0xff]
    %v52 = vld [vmem:[#allocation2 + $0x98] sm:$0xff]
    %v53 = vld [vmem:[#allocation2 + $0xa0] sm:$0xff]
    %v54 = vld [vmem:[#allocation2 + $0xa8] sm:$0xff]
    %v55 = vld [vmem:[#allocation2 + $0xb0] sm:$0xff]
    %v56 = vld [vmem:[#allocation2 + $0xb8] sm:$0xff]
    %v57 = vld [vmem:[#allocation2 + $0xc0] sm:$0xff]
    %v58 = vld [vmem:[#allocation2 + $0xc8] sm:$0xff]
    %v59 = vld [vmem:[#allocation2 + $0xd0] sm:$0xff]
    %v60 = vld [vmem:[#allocation2 + $0xd8] sm:$0xff]
    %v61 = vld [vmem:[#allocation2 + $0xe0] sm:$0xff]
    %v62 = vld [vmem:[#allocation2 + $0xe8] sm:$0xff]
    %v63 = vld [vmem:[#allocation2 + $0xf0] sm:$0xff]
    %v64 = vld [vmem:[#allocation2 + $0xf8] sm:$0xff]
    %v65 = vld [vmem:[%s2] sm:$0x3]
    %v67 = vlaneseq
    %v68 = vshrl.u32 %v67, 7
    %v69 = vsub.s32 0, %v68
    %v70 = vrot.slane %v65, %v69
    %v71 = vlaneseq
    %v72 = vshrl.u32 %v71, 7
    %v73 = vsub.s32 1, %v72
    %v74 = vrot.slane %v65, %v73
    %v109 = vunpack.c.l.b16 %v33
    %v110 = vunpack.c.h.b16 %v33
    %v111 = vunpack.c.l.b16 %v34
    %v112 = vunpack.c.h.b16 %v34
    %v113 = vunpack.c.l.b16 %v35
    %v114 = vunpack.c.h.b16 %v35
    %v115 = vunpack.c.l.b16 %v36
    %v116 = vunpack.c.h.b16 %v36
    %v117 = vunpack.c.l.b16 %v37
    %v118 = vunpack.c.h.b16 %v37
    %v119 = vunpack.c.l.b16 %v38
    %v120 = vunpack.c.h.b16 %v38
    %v121 = vunpack.c.l.b16 %v39
    %v122 = vunpack.c.h.b16 %v39
    %v123 = vunpack.c.l.b16 %v40
    %v124 = vunpack.c.h.b16 %v40
    %v125 = vunpack.c.l.b16 %v41
    %v126 = vunpack.c.h.b16 %v41
    %v127 = vunpack.c.l.b16 %v42
    %v128 = vunpack.c.h.b16 %v42
    %v129 = vunpack.c.l.b16 %v43
    %v130 = vunpack.c.h.b16 %v43
    %v131 = vunpack.c.l.b16 %v44
    %v132 = vunpack.c.h.b16 %v44
    %v133 = vunpack.c.l.b16 %v45
    %v134 = vunpack.c.h.b16 %v45
    %v135 = vunpack.c.l.b16 %v46
    %v136 = vunpack.c.h.b16 %v46
    %v137 = vunpack.c.l.b16 %v47
    %v138 = vunpack.c.h.b16 %v47
    %v139 = vunpack.c.l.b16 %v48
    %v140 = vunpack.c.h.b16 %v48
    %v141 = vunpack.c.l.b16 %v49
    %v142 = vunpack.c.h.b16 %v49
    %v143 = vunpack.c.l.b16 %v50
    %v144 = vunpack.c.h.b16 %v50
    %v145 = vunpack.c.l.b16 %v51
    %v146 = vunpack.c.h.b16 %v51
    %v147 = vunpack.c.l.b16 %v52
    %v148 = vunpack.c.h.b16 %v52
    %v149 = vunpack.c.l.b16 %v53
    %v150 = vunpack.c.h.b16 %v53
    %v151 = vunpack.c.l.b16 %v54
    %v152 = vunpack.c.h.b16 %v54
    %v153 = vunpack.c.l.b16 %v55
    %v154 = vunpack.c.h.b16 %v55
    %v155 = vunpack.c.l.b16 %v56
    %v156 = vunpack.c.h.b16 %v56
    %v157 = vunpack.c.l.b16 %v57
    %v158 = vunpack.c.h.b16 %v57
    %v159 = vunpack.c.l.b16 %v58
    %v160 = vunpack.c.h.b16 %v58
    %v161 = vunpack.c.l.b16 %v59
    %v162 = vunpack.c.h.b16 %v59
    %v163 = vunpack.c.l.b16 %v60
    %v164 = vunpack.c.h.b16 %v60
    %v165 = vunpack.c.l.b16 %v61
    %v166 = vunpack.c.h.b16 %v61
    %v167 = vunpack.c.l.b16 %v62
    %v168 = vunpack.c.h.b16 %v62
    %v169 = vunpack.c.l.b16 %v63
    %v170 = vunpack.c.h.b16 %v63
    %v171 = vunpack.c.l.b16 %v64
    %v172 = vunpack.c.h.b16 %v64
    %v173 = vpack.c.b16 %v111, %v109
    %v174 = vpack.c.b16 %v112, %v110
    %v175 = vpack.c.b16 %v115, %v113
    %v176 = vpack.c.b16 %v116, %v114
    %v177 = vpack.c.b16 %v119, %v117
    %v178 = vpack.c.b16 %v120, %v118
    %v179 = vpack.c.b16 %v123, %v121
    %v180 = vpack.c.b16 %v124, %v122
    %v181 = vpack.c.b16 %v127, %v125
    %v182 = vpack.c.b16 %v128, %v126
    %v183 = vpack.c.b16 %v131, %v129
    %v184 = vpack.c.b16 %v132, %v130
    %v185 = vpack.c.b16 %v135, %v133
    %v186 = vpack.c.b16 %v136, %v134
    %v187 = vpack.c.b16 %v139, %v137
    %v188 = vpack.c.b16 %v140, %v138
    %v189 = vpack.c.b16 %v143, %v141
    %v190 = vpack.c.b16 %v144, %v142
    %v191 = vpack.c.b16 %v147, %v145
    %v192 = vpack.c.b16 %v148, %v146
    %v193 = vpack.c.b16 %v151, %v149
    %v194 = vpack.c.b16 %v152, %v150
    %v195 = vpack.c.b16 %v155, %v153
    %v196 = vpack.c.b16 %v156, %v154
    %v197 = vpack.c.b16 %v159, %v157
    %v198 = vpack.c.b16 %v160, %v158
    %v199 = vpack.c.b16 %v163, %v161
    %v200 = vpack.c.b16 %v164, %v162
    %v201 = vpack.c.b16 %v167, %v165
    %v202 = vpack.c.b16 %v168, %v166
    %v203 = vpack.c.b16 %v171, %v169
    %v204 = vpack.c.b16 %v172, %v170
    %237 = vmatprep.subr.bf16.mxu0 %v174
    %238 = vmatpush1.bf16.msra.mxu0 %v173
    %239 = vmatprep.subr.bf16.mxu0 %v176
    %240 = vmatpush1.bf16.msra.mxu0 %v175
    %241 = vmatprep.subr.bf16.mxu0 %v178
    %242 = vmatpush1.bf16.msra.mxu0 %v177
    %243 = vmatprep.subr.bf16.mxu0 %v180
    %244 = vmatpush1.bf16.msra.mxu0 %v179
    %245 = vmatprep.subr.bf16.mxu0 %v182
    %246 = vmatpush1.bf16.msra.mxu0 %v181
    %247 = vmatprep.subr.bf16.mxu0 %v184
    %248 = vmatpush1.bf16.msra.mxu0 %v183
    %249 = vmatprep.subr.bf16.mxu0 %v186
    %250 = vmatpush1.bf16.msra.mxu0 %v185
    %251 = vmatprep.subr.bf16.mxu0 %v188
    %252 = vmatpush1.bf16.msra.mxu0 %v187
    %253 = vmatprep.subr.bf16.mxu0 %v190
    %254 = vmatpush1.bf16.msra.mxu0 %v189
    %255 = vmatprep.subr.bf16.mxu0 %v192
    %256 = vmatpush1.bf16.msra.mxu0 %v191
    %257 = vmatprep.subr.bf16.mxu0 %v194
    %258 = vmatpush1.bf16.msra.mxu0 %v193
    %259 = vmatprep.subr.bf16.mxu0 %v196
    %260 = vmatpush1.bf16.msra.mxu0 %v195
    %261 = vmatprep.subr.bf16.mxu0 %v198
    %262 = vmatpush1.bf16.msra.mxu0 %v197
    %263 = vmatprep.subr.bf16.mxu0 %v200
    %264 = vmatpush1.bf16.msra.mxu0 %v199
    %265 = vmatprep.subr.bf16.mxu0 %v202
    %266 = vmatpush1.bf16.msra.mxu0 %v201
    %267 = vmatprep.subr.bf16.mxu0 %v204
    %268 = vmatpush1.bf16.msra.mxu0 %v203
    %269 = vmatprep.mubr.bf16.mxu0 %v32
    %270 = vmatmul.mubr.bf16.gmra.mrb[0].mxu0 %v31
    %v271 = vpop.f32.mrb[0].mxu0
    %v272 = vadd.f32 %v70, %v271
    %v273 = vpop.f32.mrb[0].mxu0
    %v274 = vadd.f32 %v74, %v273
    %v275 = vpop.f32.mrb[0].mxu0
    %v276 = vpop.f32.mrb[0].mxu0
    %277 = vdwg.mxu0
    %v278 = vmax.f32 %v272, 0.0
    %v279 = vmax.f32 %v274, 0.0
    %v280 = vpack.c.bf16 %v278, %v278
    %v281 = vpack.c.bf16 %v279, %v279
    %s282 = scalar_lea.vmem [#allocation2], 256
    %v283 = vld [vmem:[%s282] sm:$0xff]
    %v284 = vld [vmem:[%s282 + $0x8] sm:$0xff]
    %v285 = vld [vmem:[%s282 + $0x10] sm:$0xff]
    %v286 = vld [vmem:[%s282 + $0x18] sm:$0xff]
    %v287 = vld [vmem:[%s282 + $0x20] sm:$0xff]
    %v288 = vld [vmem:[%s282 + $0x28] sm:$0xff]
    %v289 = vld [vmem:[%s282 + $0x30] sm:$0xff]
    %v290 = vld [vmem:[%s282 + $0x38] sm:$0xff]
    %v291 = vld [vmem:[%s282 + $0x40] sm:$0xff]
    %v292 = vld [vmem:[%s282 + $0x48] sm:$0xff]
    %v293 = vld [vmem:[%s282 + $0x50] sm:$0xff]
    %v294 = vld [vmem:[%s282 + $0x58] sm:$0xff]
    %v295 = vld [vmem:[%s282 + $0x60] sm:$0xff]
    %v296 = vld [vmem:[%s282 + $0x68] sm:$0xff]
    %v297 = vld [vmem:[%s282 + $0x70] sm:$0xff]
    %v298 = vld [vmem:[%s282 + $0x78] sm:$0xff]
    %v299 = vld [vmem:[%s282 + $0x80] sm:$0xff]
    %v300 = vld [vmem:[%s282 + $0x88] sm:$0xff]
    %v301 = vld [vmem:[%s282 + $0x90] sm:$0xff]
    %v302 = vld [vmem:[%s282 + $0x98] sm:$0xff]
    %v303 = vld [vmem:[%s282 + $0xa0] sm:$0xff]
    %v304 = vld [vmem:[%s282 + $0xa8] sm:$0xff]
    %v305 = vld [vmem:[%s282 + $0xb0] sm:$0xff]
    %v306 = vld [vmem:[%s282 + $0xb8] sm:$0xff]
    %v307 = vld [vmem:[%s282 + $0xc0] sm:$0xff]
    %v308 = vld [vmem:[%s282 + $0xc8] sm:$0xff]
    %v309 = vld [vmem:[%s282 + $0xd0] sm:$0xff]
    %v310 = vld [vmem:[%s282 + $0xd8] sm:$0xff]
    %v311 = vld [vmem:[%s282 + $0xe0] sm:$0xff]
    %v312 = vld [vmem:[%s282 + $0xe8] sm:$0xff]
    %v313 = vld [vmem:[%s282 + $0xf0] sm:$0xff]
    %v314 = vld [vmem:[%s282 + $0xf8] sm:$0xff]
    %s315 = scalar_lea.vmem %s2, 2
    %v316 = vld [vmem:[%s315] sm:$0x3]
    %v318 = vlaneseq
    %v319 = vshrl.u32 %v318, 7
    %v320 = vsub.s32 0, %v319
    %v321 = vrot.slane %v316, %v320
    %v322 = vlaneseq
    %v323 = vshrl.u32 %v322, 7
    %v324 = vsub.s32 1, %v323
    %v325 = vrot.slane %v316, %v324
    %v360 = vunpack.c.l.b16 %v283
    %v361 = vunpack.c.h.b16 %v283
    %v362 = vunpack.c.l.b16 %v284
    %v363 = vunpack.c.h.b16 %v284
    %v364 = vunpack.c.l.b16 %v285
    %v365 = vunpack.c.h.b16 %v285
    %v366 = vunpack.c.l.b16 %v286
    %v367 = vunpack.c.h.b16 %v286
    %v368 = vunpack.c.l.b16 %v287
    %v369 = vunpack.c.h.b16 %v287
    %v370 = vunpack.c.l.b16 %v288
    %v371 = vunpack.c.h.b16 %v288
    %v372 = vunpack.c.l.b16 %v289
    %v373 = vunpack.c.h.b16 %v289
    %v374 = vunpack.c.l.b16 %v290
    %v375 = vunpack.c.h.b16 %v290
    %v376 = vunpack.c.l.b16 %v291
    %v377 = vunpack.c.h.b16 %v291
    %v378 = vunpack.c.l.b16 %v292
    %v379 = vunpack.c.h.b16 %v292
    %v380 = vunpack.c.l.b16 %v293
    %v381 = vunpack.c.h.b16 %v293
    %v382 = vunpack.c.l.b16 %v294
    %v383 = vunpack.c.h.b16 %v294
    %v384 = vunpack.c.l.b16 %v295
    %v385 = vunpack.c.h.b16 %v295
    %v386 = vunpack.c.l.b16 %v296
    %v387 = vunpack.c.h.b16 %v296
    %v388 = vunpack.c.l.b16 %v297
    %v389 = vunpack.c.h.b16 %v297
    %v390 = vunpack.c.l.b16 %v298
    %v391 = vunpack.c.h.b16 %v298
    %v392 = vunpack.c.l.b16 %v299
    %v393 = vunpack.c.h.b16 %v299
    %v394 = vunpack.c.l.b16 %v300
    %v395 = vunpack.c.h.b16 %v300
    %v396 = vunpack.c.l.b16 %v301
    %v397 = vunpack.c.h.b16 %v301
    %v398 = vunpack.c.l.b16 %v302
    %v399 = vunpack.c.h.b16 %v302
    %v400 = vunpack.c.l.b16 %v303
    %v401 = vunpack.c.h.b16 %v303
    %v402 = vunpack.c.l.b16 %v304
    %v403 = vunpack.c.h.b16 %v304
    %v404 = vunpack.c.l.b16 %v305
    %v405 = vunpack.c.h.b16 %v305
    %v406 = vunpack.c.l.b16 %v306
    %v407 = vunpack.c.h.b16 %v306
    %v408 = vunpack.c.l.b16 %v307
    %v409 = vunpack.c.h.b16 %v307
    %v410 = vunpack.c.l.b16 %v308
    %v411 = vunpack.c.h.b16 %v308
    %v412 = vunpack.c.l.b16 %v309
    %v413 = vunpack.c.h.b16 %v309
    %v414 = vunpack.c.l.b16 %v310
    %v415 = vunpack.c.h.b16 %v310
    %v416 = vunpack.c.l.b16 %v311
    %v417 = vunpack.c.h.b16 %v311
    %v418 = vunpack.c.l.b16 %v312
    %v419 = vunpack.c.h.b16 %v312
    %v420 = vunpack.c.l.b16 %v313
    %v421 = vunpack.c.h.b16 %v313
    %v422 = vunpack.c.l.b16 %v314
    %v423 = vunpack.c.h.b16 %v314
    %v424 = vpack.c.b16 %v362, %v360
    %v425 = vpack.c.b16 %v363, %v361
    %v426 = vpack.c.b16 %v366, %v364
    %v427 = vpack.c.b16 %v367, %v365
    %v428 = vpack.c.b16 %v370, %v368
    %v429 = vpack.c.b16 %v371, %v369
    %v430 = vpack.c.b16 %v374, %v372
    %v431 = vpack.c.b16 %v375, %v373
    %v432 = vpack.c.b16 %v378, %v376
    %v433 = vpack.c.b16 %v379, %v377
    %v434 = vpack.c.b16 %v382, %v380
    %v435 = vpack.c.b16 %v383, %v381
    %v436 = vpack.c.b16 %v386, %v384
    %v437 = vpack.c.b16 %v387, %v385
    %v438 = vpack.c.b16 %v390, %v388
    %v439 = vpack.c.b16 %v391, %v389
    %v440 = vpack.c.b16 %v394, %v392
    %v441 = vpack.c.b16 %v395, %v393
    %v442 = vpack.c.b16 %v398, %v396
    %v443 = vpack.c.b16 %v399, %v397
    %v444 = vpack.c.b16 %v402, %v400
    %v445 = vpack.c.b16 %v403, %v401
    %v446 = vpack.c.b16 %v406, %v404
    %v447 = vpack.c.b16 %v407, %v405
    %v448 = vpack.c.b16 %v410, %v408
    %v449 = vpack.c.b16 %v411, %v409
    %v450 = vpack.c.b16 %v414, %v412
    %v451 = vpack.c.b16 %v415, %v413
    %v452 = vpack.c.b16 %v418, %v416
    %v453 = vpack.c.b16 %v419, %v417
    %v454 = vpack.c.b16 %v422, %v420
    %v455 = vpack.c.b16 %v423, %v421
    %488 = vmatprep.subr.bf16.mxu0 %v425
    %489 = vmatpush1.bf16.msra.mxu0 %v424
    %490 = vmatprep.subr.bf16.mxu0 %v427
    %491 = vmatpush1.bf16.msra.mxu0 %v426
    %492 = vmatprep.subr.bf16.mxu0 %v429
    %493 = vmatpush1.bf16.msra.mxu0 %v428
    %494 = vmatprep.subr.bf16.mxu0 %v431
    %495 = vmatpush1.bf16.msra.mxu0 %v430
    %496 = vmatprep.subr.bf16.mxu0 %v433
    %497 = vmatpush1.bf16.msra.mxu0 %v432
    %498 = vmatprep.subr.bf16.mxu0 %v435
    %499 = vmatpush1.bf16.msra.mxu0 %v434
    %500 = vmatprep.subr.bf16.mxu0 %v437
    %501 = vmatpush1.bf16.msra.mxu0 %v436
    %502 = vmatprep.subr.bf16.mxu0 %v439
    %503 = vmatpush1.bf16.msra.mxu0 %v438
    %504 = vmatprep.subr.bf16.mxu0 %v441
    %505 = vmatpush1.bf16.msra.mxu0 %v440
    %506 = vmatprep.subr.bf16.mxu0 %v443
    %507 = vmatpush1.bf16.msra.mxu0 %v442
    %508 = vmatprep.subr.bf16.mxu0 %v445
    %509 = vmatpush1.bf16.msra.mxu0 %v444
    %510 = vmatprep.subr.bf16.mxu0 %v447
    %511 = vmatpush1.bf16.msra.mxu0 %v446
    %512 = vmatprep.subr.bf16.mxu0 %v449
    %513 = vmatpush1.bf16.msra.mxu0 %v448
    %514 = vmatprep.subr.bf16.mxu0 %v451
    %515 = vmatpush1.bf16.msra.mxu0 %v450
    %516 = vmatprep.subr.bf16.mxu0 %v453
    %517 = vmatpush1.bf16.msra.mxu0 %v452
    %518 = vmatprep.subr.bf16.mxu0 %v455
    %519 = vmatpush1.bf16.msra.mxu0 %v454
    %520 = vmatprep.mubr.bf16.mxu0 %v281
    %521 = vmatmul.mubr.bf16.gmra.mrb[0].mxu0 %v280
    %v522 = vpop.f32.mrb[0].mxu0
    %v523 = vadd.f32 %v321, %v522
    %v524 = vpop.f32.mrb[0].mxu0
    %v525 = vadd.f32 %v325, %v524
    %v526 = vpop.f32.mrb[0].mxu0
    %v527 = vpop.f32.mrb[0].mxu0
    %528 = vdwg.mxu0
    %v529 = vmax.f32 %v523, 0.0
    %v530 = vmax.f32 %v525, 0.0
    %v531 = vpack.c.bf16 %v529, %v529
    %v532 = vpack.c.bf16 %v530, %v530
    %s533 = scalar_lea.vmem [#allocation2], 512
    %v534 = vld [vmem:[%s533] sm:$0xff]
    %v535 = vld [vmem:[%s533 + $0x8] sm:$0xff]
    %v536 = vld [vmem:[%s533 + $0x10] sm:$0xff]
    %v537 = vld [vmem:[%s533 + $0x18] sm:$0xff]
    %v538 = vld [vmem:[%s533 + $0x20] sm:$0xff]
    %v539 = vld [vmem:[%s533 + $0x28] sm:$0xff]
    %v540 = vld [vmem:[%s533 + $0x30] sm:$0xff]
    %v541 = vld [vmem:[%s533 + $0x38] sm:$0xff]
    %v542 = vld [vmem:[%s533 + $0x40] sm:$0xff]
    %v543 = vld [vmem:[%s533 + $0x48] sm:$0xff]
    %v544 = vld [vmem:[%s533 + $0x50] sm:$0xff]
    %v545 = vld [vmem:[%s533 + $0x58] sm:$0xff]
    %v546 = vld [vmem:[%s533 + $0x60] sm:$0xff]
    %v547 = vld [vmem:[%s533 + $0x68] sm:$0xff]
    %v548 = vld [vmem:[%s533 + $0x70] sm:$0xff]
    %v549 = vld [vmem:[%s533 + $0x78] sm:$0xff]
    %v550 = vld [vmem:[%s533 + $0x80] sm:$0xff]
    %v551 = vld [vmem:[%s533 + $0x88] sm:$0xff]
    %v552 = vld [vmem:[%s533 + $0x90] sm:$0xff]
    %v553 = vld [vmem:[%s533 + $0x98] sm:$0xff]
    %v554 = vld [vmem:[%s533 + $0xa0] sm:$0xff]
    %v555 = vld [vmem:[%s533 + $0xa8] sm:$0xff]
    %v556 = vld [vmem:[%s533 + $0xb0] sm:$0xff]
    %v557 = vld [vmem:[%s533 + $0xb8] sm:$0xff]
    %v558 = vld [vmem:[%s533 + $0xc0] sm:$0xff]
    %v559 = vld [vmem:[%s533 + $0xc8] sm:$0xff]
    %v560 = vld [vmem:[%s533 + $0xd0] sm:$0xff]
    %v561 = vld [vmem:[%s533 + $0xd8] sm:$0xff]
    %v562 = vld [vmem:[%s533 + $0xe0] sm:$0xff]
    %v563 = vld [vmem:[%s533 + $0xe8] sm:$0xff]
    %v564 = vld [vmem:[%s533 + $0xf0] sm:$0xff]
    %v565 = vld [vmem:[%s533 + $0xf8] sm:$0xff]
    %s566 = scalar_lea.vmem %s2, 4
    %v567 = vld [vmem:[%s566] sm:$0x3]
    %v569 = vlaneseq
    %v570 = vshrl.u32 %v569, 7
    %v571 = vsub.s32 0, %v570
    %v572 = vrot.slane %v567, %v571
    %v573 = vlaneseq
    %v574 = vshrl.u32 %v573, 7
    %v575 = vsub.s32 1, %v574
    %v576 = vrot.slane %v567, %v575
    %v611 = vunpack.c.l.b16 %v534
    %v612 = vunpack.c.h.b16 %v534
    %v613 = vunpack.c.l.b16 %v535
    %v614 = vunpack.c.h.b16 %v535
    %v615 = vunpack.c.l.b16 %v536
    %v616 = vunpack.c.h.b16 %v536
    %v617 = vunpack.c.l.b16 %v537
    %v618 = vunpack.c.h.b16 %v537
    %v619 = vunpack.c.l.b16 %v538
    %v620 = vunpack.c.h.b16 %v538
    %v621 = vunpack.c.l.b16 %v539
    %v622 = vunpack.c.h.b16 %v539
    %v623 = vunpack.c.l.b16 %v540
    %v624 = vunpack.c.h.b16 %v540
    %v625 = vunpack.c.l.b16 %v541
    %v626 = vunpack.c.h.b16 %v541
    %v627 = vunpack.c.l.b16 %v542
    %v628 = vunpack.c.h.b16 %v542
    %v629 = vunpack.c.l.b16 %v543
    %v630 = vunpack.c.h.b16 %v543
    %v631 = vunpack.c.l.b16 %v544
    %v632 = vunpack.c.h.b16 %v544
    %v633 = vunpack.c.l.b16 %v545
    %v634 = vunpack.c.h.b16 %v545
    %v635 = vunpack.c.l.b16 %v546
    %v636 = vunpack.c.h.b16 %v546
    %v637 = vunpack.c.l.b16 %v547
    %v638 = vunpack.c.h.b16 %v547
    %v639 = vunpack.c.l.b16 %v548
    %v640 = vunpack.c.h.b16 %v548
    %v641 = vunpack.c.l.b16 %v549
    %v642 = vunpack.c.h.b16 %v549
    %v643 = vunpack.c.l.b16 %v550
    %v644 = vunpack.c.h.b16 %v550
    %v645 = vunpack.c.l.b16 %v551
    %v646 = vunpack.c.h.b16 %v551
    %v647 = vunpack.c.l.b16 %v552
    %v648 = vunpack.c.h.b16 %v552
    %v649 = vunpack.c.l.b16 %v553
    %v650 = vunpack.c.h.b16 %v553
    %v651 = vunpack.c.l.b16 %v554
    %v652 = vunpack.c.h.b16 %v554
    %v653 = vunpack.c.l.b16 %v555
    %v654 = vunpack.c.h.b16 %v555
    %v655 = vunpack.c.l.b16 %v556
    %v656 = vunpack.c.h.b16 %v556
    %v657 = vunpack.c.l.b16 %v557
    %v658 = vunpack.c.h.b16 %v557
    %v659 = vunpack.c.l.b16 %v558
    %v660 = vunpack.c.h.b16 %v558
    %v661 = vunpack.c.l.b16 %v559
    %v662 = vunpack.c.h.b16 %v559
    %v663 = vunpack.c.l.b16 %v560
    %v664 = vunpack.c.h.b16 %v560
    %v665 = vunpack.c.l.b16 %v561
    %v666 = vunpack.c.h.b16 %v561
    %v667 = vunpack.c.l.b16 %v562
    %v668 = vunpack.c.h.b16 %v562
    %v669 = vunpack.c.l.b16 %v563
    %v670 = vunpack.c.h.b16 %v563
    %v671 = vunpack.c.l.b16 %v564
    %v672 = vunpack.c.h.b16 %v564
    %v673 = vunpack.c.l.b16 %v565
    %v674 = vunpack.c.h.b16 %v565
    %v675 = vpack.c.b16 %v613, %v611
    %v676 = vpack.c.b16 %v614, %v612
    %v677 = vpack.c.b16 %v617, %v615
    %v678 = vpack.c.b16 %v618, %v616
    %v679 = vpack.c.b16 %v621, %v619
    %v680 = vpack.c.b16 %v622, %v620
    %v681 = vpack.c.b16 %v625, %v623
    %v682 = vpack.c.b16 %v626, %v624
    %v683 = vpack.c.b16 %v629, %v627
    %v684 = vpack.c.b16 %v630, %v628
    %v685 = vpack.c.b16 %v633, %v631
    %v686 = vpack.c.b16 %v634, %v632
    %v687 = vpack.c.b16 %v637, %v635
    %v688 = vpack.c.b16 %v638, %v636
    %v689 = vpack.c.b16 %v641, %v639
    %v690 = vpack.c.b16 %v642, %v640
    %v691 = vpack.c.b16 %v645, %v643
    %v692 = vpack.c.b16 %v646, %v644
    %v693 = vpack.c.b16 %v649, %v647
    %v694 = vpack.c.b16 %v650, %v648
    %v695 = vpack.c.b16 %v653, %v651
    %v696 = vpack.c.b16 %v654, %v652
    %v697 = vpack.c.b16 %v657, %v655
    %v698 = vpack.c.b16 %v658, %v656
    %v699 = vpack.c.b16 %v661, %v659
    %v700 = vpack.c.b16 %v662, %v660
    %v701 = vpack.c.b16 %v665, %v663
    %v702 = vpack.c.b16 %v666, %v664
    %v703 = vpack.c.b16 %v669, %v667
    %v704 = vpack.c.b16 %v670, %v668
    %v705 = vpack.c.b16 %v673, %v671
    %v706 = vpack.c.b16 %v674, %v672
    %739 = vmatprep.subr.bf16.mxu0 %v676
    %740 = vmatpush1.bf16.msra.mxu0 %v675
    %741 = vmatprep.subr.bf16.mxu0 %v678
    %742 = vmatpush1.bf16.msra.mxu0 %v677
    %743 = vmatprep.subr.bf16.mxu0 %v680
    %744 = vmatpush1.bf16.msra.mxu0 %v679
    %745 = vmatprep.subr.bf16.mxu0 %v682
    %746 = vmatpush1.bf16.msra.mxu0 %v681
    %747 = vmatprep.subr.bf16.mxu0 %v684
    %748 = vmatpush1.bf16.msra.mxu0 %v683
    %749 = vmatprep.subr.bf16.mxu0 %v686
    %750 = vmatpush1.bf16.msra.mxu0 %v685
    %751 = vmatprep.subr.bf16.mxu0 %v688
    %752 = vmatpush1.bf16.msra.mxu0 %v687
    %753 = vmatprep.subr.bf16.mxu0 %v690
    %754 = vmatpush1.bf16.msra.mxu0 %v689
    %755 = vmatprep.subr.bf16.mxu0 %v692
    %756 = vmatpush1.bf16.msra.mxu0 %v691
    %757 = vmatprep.subr.bf16.mxu0 %v694
    %758 = vmatpush1.bf16.msra.mxu0 %v693
    %759 = vmatprep.subr.bf16.mxu0 %v696
    %760 = vmatpush1.bf16.msra.mxu0 %v695
    %761 = vmatprep.subr.bf16.mxu0 %v698
    %762 = vmatpush1.bf16.msra.mxu0 %v697
    %763 = vmatprep.subr.bf16.mxu0 %v700
    %764 = vmatpush1.bf16.msra.mxu0 %v699
    %765 = vmatprep.subr.bf16.mxu0 %v702
    %766 = vmatpush1.bf16.msra.mxu0 %v701
    %767 = vmatprep.subr.bf16.mxu0 %v704
    %768 = vmatpush1.bf16.msra.mxu0 %v703
    %769 = vmatprep.subr.bf16.mxu0 %v706
    %770 = vmatpush1.bf16.msra.mxu0 %v705
    %771 = vmatprep.mubr.bf16.mxu0 %v532
    %772 = vmatmul.mubr.bf16.gmra.mrb[0].mxu0 %v531
    %v773 = vpop.f32.mrb[0].mxu0
    %v774 = vadd.f32 %v572, %v773
    %v775 = vpop.f32.mrb[0].mxu0
    %v776 = vadd.f32 %v576, %v775
    %v777 = vpop.f32.mrb[0].mxu0
    %v778 = vpop.f32.mrb[0].mxu0
    %779 = vdwg.mxu0
    %v780 = vmax.f32 %v774, 0.0
    %v781 = vmax.f32 %v776, 0.0
    %v782 = vpack.c.bf16 %v780, %v780
    %v783 = vpack.c.bf16 %v781, %v781
    %s784 = scalar_lea.vmem [#allocation2], 768
    %v785 = vld [vmem:[%s784] sm:$0xff]
    %v786 = vld [vmem:[%s784 + $0x8] sm:$0xff]
    %v787 = vld [vmem:[%s784 + $0x10] sm:$0xff]
    %v788 = vld [vmem:[%s784 + $0x18] sm:$0xff]
    %v789 = vld [vmem:[%s784 + $0x20] sm:$0xff]
    %v790 = vld [vmem:[%s784 + $0x28] sm:$0xff]
    %v791 = vld [vmem:[%s784 + $0x30] sm:$0xff]
    %v792 = vld [vmem:[%s784 + $0x38] sm:$0xff]
    %v793 = vld [vmem:[%s784 + $0x40] sm:$0xff]
    %v794 = vld [vmem:[%s784 + $0x48] sm:$0xff]
    %v795 = vld [vmem:[%s784 + $0x50] sm:$0xff]
    %v796 = vld [vmem:[%s784 + $0x58] sm:$0xff]
    %v797 = vld [vmem:[%s784 + $0x60] sm:$0xff]
    %v798 = vld [vmem:[%s784 + $0x68] sm:$0xff]
    %v799 = vld [vmem:[%s784 + $0x70] sm:$0xff]
    %v800 = vld [vmem:[%s784 + $0x78] sm:$0xff]
    %v801 = vld [vmem:[%s784 + $0x80] sm:$0xff]
    %v802 = vld [vmem:[%s784 + $0x88] sm:$0xff]
    %v803 = vld [vmem:[%s784 + $0x90] sm:$0xff]
    %v804 = vld [vmem:[%s784 + $0x98] sm:$0xff]
    %v805 = vld [vmem:[%s784 + $0xa0] sm:$0xff]
    %v806 = vld [vmem:[%s784 + $0xa8] sm:$0xff]
    %v807 = vld [vmem:[%s784 + $0xb0] sm:$0xff]
    %v808 = vld [vmem:[%s784 + $0xb8] sm:$0xff]
    %v809 = vld [vmem:[%s784 + $0xc0] sm:$0xff]
    %v810 = vld [vmem:[%s784 + $0xc8] sm:$0xff]
    %v811 = vld [vmem:[%s784 + $0xd0] sm:$0xff]
    %v812 = vld [vmem:[%s784 + $0xd8] sm:$0xff]
    %v813 = vld [vmem:[%s784 + $0xe0] sm:$0xff]
    %v814 = vld [vmem:[%s784 + $0xe8] sm:$0xff]
    %v815 = vld [vmem:[%s784 + $0xf0] sm:$0xff]
    %v816 = vld [vmem:[%s784 + $0xf8] sm:$0xff]
    %s817 = scalar_lea.vmem %s2, 6
    %v818 = vld [vmem:[%s817] sm:$0x3]
    %v820 = vlaneseq
    %v821 = vshrl.u32 %v820, 7
    %v822 = vsub.s32 0, %v821
    %v823 = vrot.slane %v818, %v822
    %v824 = vlaneseq
    %v825 = vshrl.u32 %v824, 7
    %v826 = vsub.s32 1, %v825
    %v827 = vrot.slane %v818, %v826
    %v862 = vunpack.c.l.b16 %v785
    %v863 = vunpack.c.h.b16 %v785
    %v864 = vunpack.c.l.b16 %v786
    %v865 = vunpack.c.h.b16 %v786
    %v866 = vunpack.c.l.b16 %v787
    %v867 = vunpack.c.h.b16 %v787
    %v868 = vunpack.c.l.b16 %v788
    %v869 = vunpack.c.h.b16 %v788
    %v870 = vunpack.c.l.b16 %v789
    %v871 = vunpack.c.h.b16 %v789
    %v872 = vunpack.c.l.b16 %v790
    %v873 = vunpack.c.h.b16 %v790
    %v874 = vunpack.c.l.b16 %v791
    %v875 = vunpack.c.h.b16 %v791
    %v876 = vunpack.c.l.b16 %v792
    %v877 = vunpack.c.h.b16 %v792
    %v878 = vunpack.c.l.b16 %v793
    %v879 = vunpack.c.h.b16 %v793
    %v880 = vunpack.c.l.b16 %v794
    %v881 = vunpack.c.h.b16 %v794
    %v882 = vunpack.c.l.b16 %v795
    %v883 = vunpack.c.h.b16 %v795
    %v884 = vunpack.c.l.b16 %v796
    %v885 = vunpack.c.h.b16 %v796
    %v886 = vunpack.c.l.b16 %v797
    %v887 = vunpack.c.h.b16 %v797
    %v888 = vunpack.c.l.b16 %v798
    %v889 = vunpack.c.h.b16 %v798
    %v890 = vunpack.c.l.b16 %v799
    %v891 = vunpack.c.h.b16 %v799
    %v892 = vunpack.c.l.b16 %v800
    %v893 = vunpack.c.h.b16 %v800
    %v894 = vunpack.c.l.b16 %v801
    %v895 = vunpack.c.h.b16 %v801
    %v896 = vunpack.c.l.b16 %v802
    %v897 = vunpack.c.h.b16 %v802
    %v898 = vunpack.c.l.b16 %v803
    %v899 = vunpack.c.h.b16 %v803
    %v900 = vunpack.c.l.b16 %v804
    %v901 = vunpack.c.h.b16 %v804
    %v902 = vunpack.c.l.b16 %v805
    %v903 = vunpack.c.h.b16 %v805
    %v904 = vunpack.c.l.b16 %v806
    %v905 = vunpack.c.h.b16 %v806
    %v906 = vunpack.c.l.b16 %v807
    %v907 = vunpack.c.h.b16 %v807
    %v908 = vunpack.c.l.b16 %v808
    %v909 = vunpack.c.h.b16 %v808
    %v910 = vunpack.c.l.b16 %v809
    %v911 = vunpack.c.h.b16 %v809
    %v912 = vunpack.c.l.b16 %v810
    %v913 = vunpack.c.h.b16 %v810
    %v914 = vunpack.c.l.b16 %v811
    %v915 = vunpack.c.h.b16 %v811
    %v916 = vunpack.c.l.b16 %v812
    %v917 = vunpack.c.h.b16 %v812
    %v918 = vunpack.c.l.b16 %v813
    %v919 = vunpack.c.h.b16 %v813
    %v920 = vunpack.c.l.b16 %v814
    %v921 = vunpack.c.h.b16 %v814
    %v922 = vunpack.c.l.b16 %v815
    %v923 = vunpack.c.h.b16 %v815
    %v924 = vunpack.c.l.b16 %v816
    %v925 = vunpack.c.h.b16 %v816
    %v926 = vpack.c.b16 %v864, %v862
    %v927 = vpack.c.b16 %v865, %v863
    %v928 = vpack.c.b16 %v868, %v866
    %v929 = vpack.c.b16 %v869, %v867
    %v930 = vpack.c.b16 %v872, %v870
    %v931 = vpack.c.b16 %v873, %v871
    %v932 = vpack.c.b16 %v876, %v874
    %v933 = vpack.c.b16 %v877, %v875
    %v934 = vpack.c.b16 %v880, %v878
    %v935 = vpack.c.b16 %v881, %v879
    %v936 = vpack.c.b16 %v884, %v882
    %v937 = vpack.c.b16 %v885, %v883
    %v938 = vpack.c.b16 %v888, %v886
    %v939 = vpack.c.b16 %v889, %v887
    %v940 = vpack.c.b16 %v892, %v890
    %v941 = vpack.c.b16 %v893, %v891
    %v942 = vpack.c.b16 %v896, %v894
    %v943 = vpack.c.b16 %v897, %v895
    %v944 = vpack.c.b16 %v900, %v898
    %v945 = vpack.c.b16 %v901, %v899
    %v946 = vpack.c.b16 %v904, %v902
    %v947 = vpack.c.b16 %v905, %v903
    %v948 = vpack.c.b16 %v908, %v906
    %v949 = vpack.c.b16 %v909, %v907
    %v950 = vpack.c.b16 %v912, %v910
    %v951 = vpack.c.b16 %v913, %v911
    %v952 = vpack.c.b16 %v916, %v914
    %v953 = vpack.c.b16 %v917, %v915
    %v954 = vpack.c.b16 %v920, %v918
    %v955 = vpack.c.b16 %v921, %v919
    %v956 = vpack.c.b16 %v924, %v922
    %v957 = vpack.c.b16 %v925, %v923
    %990 = vmatprep.subr.bf16.mxu0 %v927
    %991 = vmatpush1.bf16.msra.mxu0 %v926
    %992 = vmatprep.subr.bf16.mxu0 %v929
    %993 = vmatpush1.bf16.msra.mxu0 %v928
    %994 = vmatprep.subr.bf16.mxu0 %v931
    %995 = vmatpush1.bf16.msra.mxu0 %v930
    %996 = vmatprep.subr.bf16.mxu0 %v933
    %997 = vmatpush1.bf16.msra.mxu0 %v932
    %998 = vmatprep.subr.bf16.mxu0 %v935
    %999 = vmatpush1.bf16.msra.mxu0 %v934
    %1000 = vmatprep.subr.bf16.mxu0 %v937
    %1001 = vmatpush1.bf16.msra.mxu0 %v936
    %1002 = vmatprep.subr.bf16.mxu0 %v939
    %1003 = vmatpush1.bf16.msra.mxu0 %v938
    %1004 = vmatprep.subr.bf16.mxu0 %v941
    %1005 = vmatpush1.bf16.msra.mxu0 %v940
    %1006 = vmatprep.subr.bf16.mxu0 %v943
    %1007 = vmatpush1.bf16.msra.mxu0 %v942
    %1008 = vmatprep.subr.bf16.mxu0 %v945
    %1009 = vmatpush1.bf16.msra.mxu0 %v944
    %1010 = vmatprep.subr.bf16.mxu0 %v947
    %1011 = vmatpush1.bf16.msra.mxu0 %v946
    %1012 = vmatprep.subr.bf16.mxu0 %v949
    %1013 = vmatpush1.bf16.msra.mxu0 %v948
    %1014 = vmatprep.subr.bf16.mxu0 %v951
    %1015 = vmatpush1.bf16.msra.mxu0 %v950
    %1016 = vmatprep.subr.bf16.mxu0 %v953
    %1017 = vmatpush1.bf16.msra.mxu0 %v952
    %1018 = vmatprep.subr.bf16.mxu0 %v955
    %1019 = vmatpush1.bf16.msra.mxu0 %v954
    %1020 = vmatprep.subr.bf16.mxu0 %v957
    %1021 = vmatpush1.bf16.msra.mxu0 %v956
    %1022 = vmatprep.mubr.bf16.mxu0 %v783
    %1023 = vmatmul.mubr.bf16.gmra.mrb[0].mxu0 %v782
    %v1024 = vpop.f32.mrb[0].mxu0
    %v1025 = vadd.f32 %v823, %v1024
    %v1026 = vpop.f32.mrb[0].mxu0
    %v1027 = vadd.f32 %v827, %v1026
    %v1028 = vpop.f32.mrb[0].mxu0
    %v1029 = vpop.f32.mrb[0].mxu0
    %1030 = vdwg.mxu0
    %v1031 = vmax.f32 %v1025, 0.0
    %v1032 = vmax.f32 %v1027, 0.0
    %v1033 = vpack.c.bf16 %v1031, %v1031
    %v1034 = vpack.c.bf16 %v1032, %v1032
    %s1035 = scalar_lea.vmem [#allocation2], 1024
    %v1036 = vld [vmem:[%s1035] sm:$0xff]
    %v1037 = vld [vmem:[%s1035 + $0x8] sm:$0xff]
    %v1038 = vld [vmem:[%s1035 + $0x10] sm:$0xff]
    %v1039 = vld [vmem:[%s1035 + $0x18] sm:$0xff]
    %v1040 = vld [vmem:[%s1035 + $0x20] sm:$0xff]
    %v1041 = vld [vmem:[%s1035 + $0x28] sm:$0xff]
    %v1042 = vld [vmem:[%s1035 + $0x30] sm:$0xff]
    %v1043 = vld [vmem:[%s1035 + $0x38] sm:$0xff]
    %v1044 = vld [vmem:[%s1035 + $0x40] sm:$0xff]
    %v1045 = vld [vmem:[%s1035 + $0x48] sm:$0xff]
    %v1046 = vld [vmem:[%s1035 + $0x50] sm:$0xff]
    %v1047 = vld [vmem:[%s1035 + $0x58] sm:$0xff]
    %v1048 = vld [vmem:[%s1035 + $0x60] sm:$0xff]
    %v1049 = vld [vmem:[%s1035 + $0x68] sm:$0xff]
    %v1050 = vld [vmem:[%s1035 + $0x70] sm:$0xff]
    %v1051 = vld [vmem:[%s1035 + $0x78] sm:$0xff]
    %v1052 = vld [vmem:[%s1035 + $0x80] sm:$0xff]
    %v1053 = vld [vmem:[%s1035 + $0x88] sm:$0xff]
    %v1054 = vld [vmem:[%s1035 + $0x90] sm:$0xff]
    %v1055 = vld [vmem:[%s1035 + $0x98] sm:$0xff]
    %v1056 = vld [vmem:[%s1035 + $0xa0] sm:$0xff]
    %v1057 = vld [vmem:[%s1035 + $0xa8] sm:$0xff]
    %v1058 = vld [vmem:[%s1035 + $0xb0] sm:$0xff]
    %v1059 = vld [vmem:[%s1035 + $0xb8] sm:$0xff]
    %v1060 = vld [vmem:[%s1035 + $0xc0] sm:$0xff]
    %v1061 = vld [vmem:[%s1035 + $0xc8] sm:$0xff]
    %v1062 = vld [vmem:[%s1035 + $0xd0] sm:$0xff]
    %v1063 = vld [vmem:[%s1035 + $0xd8] sm:$0xff]
    %v1064 = vld [vmem:[%s1035 + $0xe0] sm:$0xff]
    %v1065 = vld [vmem:[%s1035 + $0xe8] sm:$0xff]
    %v1066 = vld [vmem:[%s1035 + $0xf0] sm:$0xff]
    %v1067 = vld [vmem:[%s1035 + $0xf8] sm:$0xff]
    %s1068 = scalar_lea.vmem %s2, 8
    %v1069 = vld [vmem:[%s1068] sm:$0x3]
    %v1071 = vlaneseq
    %v1072 = vshrl.u32 %v1071, 7
    %v1073 = vsub.s32 0, %v1072
    %v1074 = vrot.slane %v1069, %v1073
    %v1075 = vlaneseq
    %v1076 = vshrl.u32 %v1075, 7
    %v1077 = vsub.s32 1, %v1076
    %v1078 = vrot.slane %v1069, %v1077
    %v1113 = vunpack.c.l.b16 %v1036
    %v1114 = vunpack.c.h.b16 %v1036
    %v1115 = vunpack.c.l.b16 %v1037
    %v1116 = vunpack.c.h.b16 %v1037
    %v1117 = vunpack.c.l.b16 %v1038
    %v1118 = vunpack.c.h.b16 %v1038
    %v1119 = vunpack.c.l.b16 %v1039
    %v1120 = vunpack.c.h.b16 %v1039
    %v1121 = vunpack.c.l.b16 %v1040
    %v1122 = vunpack.c.h.b16 %v1040
    %v1123 = vunpack.c.l.b16 %v1041
    %v1124 = vunpack.c.h.b16 %v1041
    %v1125 = vunpack.c.l.b16 %v1042
    %v1126 = vunpack.c.h.b16 %v1042
    %v1127 = vunpack.c.l.b16 %v1043
    %v1128 = vunpack.c.h.b16 %v1043
    %v1129 = vunpack.c.l.b16 %v1044
    %v1130 = vunpack.c.h.b16 %v1044
    %v1131 = vunpack.c.l.b16 %v1045
    %v1132 = vunpack.c.h.b16 %v1045
    %v1133 = vunpack.c.l.b16 %v1046
    %v1134 = vunpack.c.h.b16 %v1046
    %v1135 = vunpack.c.l.b16 %v1047
    %v1136 = vunpack.c.h.b16 %v1047
    %v1137 = vunpack.c.l.b16 %v1048
    %v1138 = vunpack.c.h.b16 %v1048
    %v1139 = vunpack.c.l.b16 %v1049
    %v1140 = vunpack.c.h.b16 %v1049
    %v1141 = vunpack.c.l.b16 %v1050
    %v1142 = vunpack.c.h.b16 %v1050
    %v1143 = vunpack.c.l.b16 %v1051
    %v1144 = vunpack.c.h.b16 %v1051
    %v1145 = vunpack.c.l.b16 %v1052
    %v1146 = vunpack.c.h.b16 %v1052
    %v1147 = vunpack.c.l.b16 %v1053
    %v1148 = vunpack.c.h.b16 %v1053
    %v1149 = vunpack.c.l.b16 %v1054
    %v1150 = vunpack.c.h.b16 %v1054
    %v1151 = vunpack.c.l.b16 %v1055
    %v1152 = vunpack.c.h.b16 %v1055
    %v1153 = vunpack.c.l.b16 %v1056
    %v1154 = vunpack.c.h.b16 %v1056
    %v1155 = vunpack.c.l.b16 %v1057
    %v1156 = vunpack.c.h.b16 %v1057
    %v1157 = vunpack.c.l.b16 %v1058
    %v1158 = vunpack.c.h.b16 %v1058
    %v1159 = vunpack.c.l.b16 %v1059
    %v1160 = vunpack.c.h.b16 %v1059
    %v1161 = vunpack.c.l.b16 %v1060
    %v1162 = vunpack.c.h.b16 %v1060
    %v1163 = vunpack.c.l.b16 %v1061
    %v1164 = vunpack.c.h.b16 %v1061
    %v1165 = vunpack.c.l.b16 %v1062
    %v1166 = vunpack.c.h.b16 %v1062
    %v1167 = vunpack.c.l.b16 %v1063
    %v1168 = vunpack.c.h.b16 %v1063
    %v1169 = vunpack.c.l.b16 %v1064
    %v1170 = vunpack.c.h.b16 %v1064
    %v1171 = vunpack.c.l.b16 %v1065
    %v1172 = vunpack.c.h.b16 %v1065
    %v1173 = vunpack.c.l.b16 %v1066
    %v1174 = vunpack.c.h.b16 %v1066
    %v1175 = vunpack.c.l.b16 %v1067
    %v1176 = vunpack.c.h.b16 %v1067
    %v1177 = vpack.c.b16 %v1115, %v1113
    %v1178 = vpack.c.b16 %v1116, %v1114
    %v1179 = vpack.c.b16 %v1119, %v1117
    %v1180 = vpack.c.b16 %v1120, %v1118
    %v1181 = vpack.c.b16 %v1123, %v1121
    %v1182 = vpack.c.b16 %v1124, %v1122
    %v1183 = vpack.c.b16 %v1127, %v1125
    %v1184 = vpack.c.b16 %v1128, %v1126
    %v1185 = vpack.c.b16 %v1131, %v1129
    %v1186 = vpack.c.b16 %v1132, %v1130
    %v1187 = vpack.c.b16 %v1135, %v1133
    %v1188 = vpack.c.b16 %v1136, %v1134
    %v1189 = vpack.c.b16 %v1139, %v1137
    %v1190 = vpack.c.b16 %v1140, %v1138
    %v1191 = vpack.c.b16 %v1143, %v1141
    %v1192 = vpack.c.b16 %v1144, %v1142
    %v1193 = vpack.c.b16 %v1147, %v1145
    %v1194 = vpack.c.b16 %v1148, %v1146
    %v1195 = vpack.c.b16 %v1151, %v1149
    %v1196 = vpack.c.b16 %v1152, %v1150
    %v1197 = vpack.c.b16 %v1155, %v1153
    %v1198 = vpack.c.b16 %v1156, %v1154
    %v1199 = vpack.c.b16 %v1159, %v1157
    %v1200 = vpack.c.b16 %v1160, %v1158
    %v1201 = vpack.c.b16 %v1163, %v1161
    %v1202 = vpack.c.b16 %v1164, %v1162
    %v1203 = vpack.c.b16 %v1167, %v1165
    %v1204 = vpack.c.b16 %v1168, %v1166
    %v1205 = vpack.c.b16 %v1171, %v1169
    %v1206 = vpack.c.b16 %v1172, %v1170
    %v1207 = vpack.c.b16 %v1175, %v1173
    %v1208 = vpack.c.b16 %v1176, %v1174
    %1241 = vmatprep.subr.bf16.mxu0 %v1178
    %1242 = vmatpush1.bf16.msra.mxu0 %v1177
    %1243 = vmatprep.subr.bf16.mxu0 %v1180
    %1244 = vmatpush1.bf16.msra.mxu0 %v1179
    %1245 = vmatprep.subr.bf16.mxu0 %v1182
    %1246 = vmatpush1.bf16.msra.mxu0 %v1181
    %1247 = vmatprep.subr.bf16.mxu0 %v1184
    %1248 = vmatpush1.bf16.msra.mxu0 %v1183
    %1249 = vmatprep.subr.bf16.mxu0 %v1186
    %1250 = vmatpush1.bf16.msra.mxu0 %v1185
    %1251 = vmatprep.subr.bf16.mxu0 %v1188
    %1252 = vmatpush1.bf16.msra.mxu0 %v1187
    %1253 = vmatprep.subr.bf16.mxu0 %v1190
    %1254 = vmatpush1.bf16.msra.mxu0 %v1189
    %1255 = vmatprep.subr.bf16.mxu0 %v1192
    %1256 = vmatpush1.bf16.msra.mxu0 %v1191
    %1257 = vmatprep.subr.bf16.mxu0 %v1194
    %1258 = vmatpush1.bf16.msra.mxu0 %v1193
    %1259 = vmatprep.subr.bf16.mxu0 %v1196
    %1260 = vmatpush1.bf16.msra.mxu0 %v1195
    %1261 = vmatprep.subr.bf16.mxu0 %v1198
    %1262 = vmatpush1.bf16.msra.mxu0 %v1197
    %1263 = vmatprep.subr.bf16.mxu0 %v1200
    %1264 = vmatpush1.bf16.msra.mxu0 %v1199
    %1265 = vmatprep.subr.bf16.mxu0 %v1202
    %1266 = vmatpush1.bf16.msra.mxu0 %v1201
    %1267 = vmatprep.subr.bf16.mxu0 %v1204
    %1268 = vmatpush1.bf16.msra.mxu0 %v1203
    %1269 = vmatprep.subr.bf16.mxu0 %v1206
    %1270 = vmatpush1.bf16.msra.mxu0 %v1205
    %1271 = vmatprep.subr.bf16.mxu0 %v1208
    %1272 = vmatpush1.bf16.msra.mxu0 %v1207
    %1273 = vmatprep.mubr.bf16.mxu0 %v1034
    %1274 = vmatmul.mubr.bf16.gmra.mrb[0].mxu0 %v1033
    %v1275 = vpop.f32.mrb[0].mxu0
    %v1276 = vadd.f32 %v1074, %v1275
    %v1277 = vpop.f32.mrb[0].mxu0
    %v1278 = vadd.f32 %v1078, %v1277
    %v1279 = vpop.f32.mrb[0].mxu0
    %v1280 = vpop.f32.mrb[0].mxu0
    %1281 = vdwg.mxu0
    %v1282 = vmax.f32 %v1276, 0.0
    %v1283 = vmax.f32 %v1278, 0.0
    %s1284 = scalar_lea.vmem [#allocation2], 1280
    %v1285 = vld [vmem:[%s1284] sm:$0xff]
    %v1286 = vld [vmem:[%s1284 + $0x8] sm:$0xff]
    %v1287 = vld [vmem:[%s1284 + $0x10] sm:$0xff]
    %v1288 = vld [vmem:[%s1284 + $0x18] sm:$0xff]
    %v1289 = vld [vmem:[%s1284 + $0x20] sm:$0xff]
    %v1290 = vld [vmem:[%s1284 + $0x28] sm:$0xff]
    %v1291 = vld [vmem:[%s1284 + $0x30] sm:$0xff]
    %v1292 = vld [vmem:[%s1284 + $0x38] sm:$0xff]
    %v1293 = vld [vmem:[%s1284 + $0x40] sm:$0xff]
    %v1294 = vld [vmem:[%s1284 + $0x48] sm:$0xff]
    %v1295 = vld [vmem:[%s1284 + $0x50] sm:$0xff]
    %v1296 = vld [vmem:[%s1284 + $0x58] sm:$0xff]
    %v1297 = vld [vmem:[%s1284 + $0x60] sm:$0xff]
    %v1298 = vld [vmem:[%s1284 + $0x68] sm:$0xff]
    %v1299 = vld [vmem:[%s1284 + $0x70] sm:$0xff]
    %v1300 = vld [vmem:[%s1284 + $0x78] sm:$0xff]
    %v1301 = vld [vmem:[%s1284 + $0x80] sm:$0xff]
    %v1302 = vld [vmem:[%s1284 + $0x88] sm:$0xff]
    %v1303 = vld [vmem:[%s1284 + $0x90] sm:$0xff]
    %v1304 = vld [vmem:[%s1284 + $0x98] sm:$0xff]
    %v1305 = vld [vmem:[%s1284 + $0xa0] sm:$0xff]
    %v1306 = vld [vmem:[%s1284 + $0xa8] sm:$0xff]
    %v1307 = vld [vmem:[%s1284 + $0xb0] sm:$0xff]
    %v1308 = vld [vmem:[%s1284 + $0xb8] sm:$0xff]
    %v1309 = vld [vmem:[%s1284 + $0xc0] sm:$0xff]
    %v1310 = vld [vmem:[%s1284 + $0xc8] sm:$0xff]
    %v1311 = vld [vmem:[%s1284 + $0xd0] sm:$0xff]
    %v1312 = vld [vmem:[%s1284 + $0xd8] sm:$0xff]
    %v1313 = vld [vmem:[%s1284 + $0xe0] sm:$0xff]
    %v1314 = vld [vmem:[%s1284 + $0xe8] sm:$0xff]
    %v1315 = vld [vmem:[%s1284 + $0xf0] sm:$0xff]
    %v1316 = vld [vmem:[%s1284 + $0xf8] sm:$0xff]
    %s1317 = scalar_lea.vmem %s2, 10
    %v1318 = vld [vmem:[%s1317] sm:$0x3]
    %v1319 = vpack.c.bf16 %v1282, %v1282
    %v1320 = vpack.c.bf16 %v1283, %v1283
    %v1322 = vlaneseq
    %v1323 = vshrl.u32 %v1322, 7
    %v1324 = vsub.s32 0, %v1323
    %v1325 = vrot.slane %v1318, %v1324
    %v1359 = vunpack.c.l.b16 %v1285
    %v1360 = vunpack.c.l.b16 %v1286
    %v1361 = vunpack.c.l.b16 %v1287
    %v1362 = vunpack.c.l.b16 %v1288
    %v1363 = vunpack.c.l.b16 %v1289
    %v1364 = vunpack.c.l.b16 %v1290
    %v1365 = vunpack.c.l.b16 %v1291
    %v1366 = vunpack.c.l.b16 %v1292
    %v1367 = vunpack.c.l.b16 %v1293
    %v1368 = vunpack.c.l.b16 %v1294
    %v1369 = vunpack.c.l.b16 %v1295
    %v1370 = vunpack.c.l.b16 %v1296
    %v1371 = vunpack.c.l.b16 %v1297
    %v1372 = vunpack.c.l.b16 %v1298
    %v1373 = vunpack.c.l.b16 %v1299
    %v1374 = vunpack.c.l.b16 %v1300
    %v1375 = vunpack.c.l.b16 %v1301
    %v1376 = vunpack.c.l.b16 %v1302
    %v1377 = vunpack.c.l.b16 %v1303
    %v1378 = vunpack.c.l.b16 %v1304
    %v1379 = vunpack.c.l.b16 %v1305
    %v1380 = vunpack.c.l.b16 %v1306
    %v1381 = vunpack.c.l.b16 %v1307
    %v1382 = vunpack.c.l.b16 %v1308
    %v1383 = vunpack.c.l.b16 %v1309
    %v1384 = vunpack.c.l.b16 %v1310
    %v1385 = vunpack.c.l.b16 %v1311
    %v1386 = vunpack.c.l.b16 %v1312
    %v1387 = vunpack.c.l.b16 %v1313
    %v1388 = vunpack.c.l.b16 %v1314
    %v1389 = vunpack.c.l.b16 %v1315
    %v1390 = vunpack.c.l.b16 %v1316
    %v1391 = vpack.c.b16 %v1360, %v1359
    %v1392 = vpack.c.b16 %v1362, %v1361
    %v1393 = vpack.c.b16 %v1364, %v1363
    %v1394 = vpack.c.b16 %v1366, %v1365
    %v1395 = vpack.c.b16 %v1368, %v1367
    %v1396 = vpack.c.b16 %v1370, %v1369
    %v1397 = vpack.c.b16 %v1372, %v1371
    %v1398 = vpack.c.b16 %v1374, %v1373
    %v1399 = vpack.c.b16 %v1376, %v1375
    %v1400 = vpack.c.b16 %v1378, %v1377
    %v1401 = vpack.c.b16 %v1380, %v1379
    %v1402 = vpack.c.b16 %v1382, %v1381
    %v1403 = vpack.c.b16 %v1384, %v1383
    %v1404 = vpack.c.b16 %v1386, %v1385
    %v1405 = vpack.c.b16 %v1388, %v1387
    %v1406 = vpack.c.b16 %v1390, %v1389
    %1423 = vmatprep.subr.bf16.mxu0 0
    %1424 = vmatpush1.bf16.msra.mxu0 %v1391
    %1425 = vmatprep.subr.bf16.mxu0 0
    %1426 = vmatpush1.bf16.msra.mxu0 %v1392
    %1427 = vmatprep.subr.bf16.mxu0 0
    %1428 = vmatpush1.bf16.msra.mxu0 %v1393
    %1429 = vmatprep.subr.bf16.mxu0 0
    %1430 = vmatpush1.bf16.msra.mxu0 %v1394
    %1431 = vmatprep.subr.bf16.mxu0 0
    %1432 = vmatpush1.bf16.msra.mxu0 %v1395
    %1433 = vmatprep.subr.bf16.mxu0 0
    %1434 = vmatpush1.bf16.msra.mxu0 %v1396
    %1435 = vmatprep.subr.bf16.mxu0 0
    %1436 = vmatpush1.bf16.msra.mxu0 %v1397
    %1437 = vmatprep.subr.bf16.mxu0 0
    %1438 = vmatpush1.bf16.msra.mxu0 %v1398
    %1439 = vmatprep.subr.bf16.mxu0 0
    %1440 = vmatpush1.bf16.msra.mxu0 %v1399
    %1441 = vmatprep.subr.bf16.mxu0 0
    %1442 = vmatpush1.bf16.msra.mxu0 %v1400
    %1443 = vmatprep.subr.bf16.mxu0 0
    %1444 = vmatpush1.bf16.msra.mxu0 %v1401
    %1445 = vmatprep.subr.bf16.mxu0 0
    %1446 = vmatpush1.bf16.msra.mxu0 %v1402
    %1447 = vmatprep.subr.bf16.mxu0 0
    %1448 = vmatpush1.bf16.msra.mxu0 %v1403
    %1449 = vmatprep.subr.bf16.mxu0 0
    %1450 = vmatpush1.bf16.msra.mxu0 %v1404
    %1451 = vmatprep.subr.bf16.mxu0 0
    %1452 = vmatpush1.bf16.msra.mxu0 %v1405
    %1453 = vmatprep.subr.bf16.mxu0 0
    %1454 = vmatpush1.bf16.msra.mxu0 %v1406
    %1455 = vmatprep.mubr.bf16.mxu0 %v1320
    %1456 = vmatmul.mubr.bf16.gmra.mrb[0].mxu0 %v1319
    %v1457 = vpop.f32.mrb[0].mxu0
    %v1458 = vadd.f32 %v1325, %v1457
    %v1459 = vpop.f32.mrb[0].mxu0
    %v1460 = vpop.f32.mrb[0].mxu0
    %v1461 = vpop.f32.mrb[0].mxu0
    %1462 = vdwg.mxu0
    %1463 = vst [vmem:[%s3] sm:$0xff] %v1458
    // Predicated region
    $region18: #{critic_forward.1} parent=1 // pred_check
      _
    $region19: #{critic_forward.1} parent=1 // pred_check_branch
      %1465 = sbr.rel (0) target = $region21
    $region20: #{critic_forward.1} parent=1 // pred_region
      _
    $region21: #{critic_forward.1} parent=1 // pred_fallthru
      _
    // Predicated region
    $region22: #{critic_forward.1} parent=1 // pred_check
      _
    $region23: #{critic_forward.1} parent=1 // pred_check_branch
      %1467 = sbr.rel (0) target = $region25
    $region24: #{critic_forward.1} parent=1 // pred_region
      _
    $region25: #{critic_forward.1} parent=1 // pred_fallthru
      _
    %1468 = vsyncpa [#allocation3], 1

</llo_original>
